<compile_context>
chip_gen: v7x
topology: tpu7x:2x2x1
jax: 0.10.0
libtpu: 0.0.40
codegen_flags: <defaults>
</compile_context>

<pallas_src>
import jax
import jax.numpy as jnp
from jax.experimental import pallas as pl
from jax.experimental.pallas import tpu as pltpu


def _round_up(x, m):
    return ((x + m - 1) // m) * m


def matmul_kernel(a_ref, b_ref, o_ref, acc_ref):
    # Zero the f32 accumulator on the first K-step.
    @pl.when(pl.program_id(2) == 0)
    def _():
        acc_ref[...] = jnp.zeros_like(acc_ref)

    acc_ref[...] += jnp.dot(
        a_ref[...], b_ref[...], preferred_element_type=jnp.float32
    )

    # Write back (wide, lane-dense block) on the last K-step only.
    @pl.when(pl.program_id(2) == pl.num_programs(2) - 1)
    def _():
        o_ref[...] = acc_ref[...].astype(o_ref.dtype)


def matmul(a, b, *, tm=512, tn=512, tk=512, compute_dtype=None,
           vmem_limit_bytes=None):
    """out = a @ b, 2-D operands. compute_dtype=jnp.bfloat16 enables the bf16
    MXU fast path (f32 accumulation is always used)."""
    M, K = a.shape
    K2, N = b.shape
    assert K == K2, "inner dimensions must match"

    out_dtype = jnp.result_type(a.dtype, b.dtype)
    if compute_dtype is not None:
        a = a.astype(compute_dtype)
        b = b.astype(compute_dtype)

    # Clamp tiles to the (hardware-aligned) problem size so small problems
    # don't get padded up to 512.
    tm = min(tm, _round_up(M, 8))      # sublane multiple
    tn = min(tn, _round_up(N, 128))    # lane multiple
    tk = min(tk, _round_up(K, 128))

    # Pad to tile multiples (zero-padding K is exact for matmul).
    Mp, Np, Kp = _round_up(M, tm), _round_up(N, tn), _round_up(K, tk)
    if (Mp, Kp) != (M, K):
        a = jnp.pad(a, ((0, Mp - M), (0, Kp - K)))
    if (Kp, Np) != (K, N):
        b = jnp.pad(b, ((0, Kp - K), (0, Np - N)))

    isz_a = a.dtype.itemsize
    isz_b = b.dtype.itemsize
    isz_o = jnp.dtype(out_dtype).itemsize

    if vmem_limit_bytes is None:
        # double-buffered A, B, out tiles + f32 acc scratch, with headroom.
        need = (2 * (tm * tk * isz_a + tk * tn * isz_b + tm * tn * isz_o)
                + tm * tn * 4)
        # 64 MiB is legal on every generation (v7x physical VMEM = 64 MiB/TC).
        vmem_limit_bytes = min(max(int(need * 1.5), 32 * 1024 * 1024),
                               64 * 1024 * 1024)

    cost = pl.CostEstimate(
        flops=2 * M * N * K,
        transcendentals=0,
        bytes_accessed=M * K * isz_a + K * N * isz_b + M * N * isz_o,
    )

    out = pl.pallas_call(
        matmul_kernel,
        out_shape=jax.ShapeDtypeStruct((Mp, Np), out_dtype),
        grid_spec=pltpu.PrefetchScalarGridSpec(
            num_scalar_prefetch=0,
            grid=(Mp // tm, Np // tn, Kp // tk),
            in_specs=[
                pl.BlockSpec((tm, tk), lambda i, j, k: (i, k)),
                pl.BlockSpec((tk, tn), lambda i, j, k: (k, j)),
            ],
            out_specs=pl.BlockSpec((tm, tn), lambda i, j, k: (i, j)),
            scratch_shapes=[pltpu.VMEM((tm, tn), jnp.float32)],
        ),
        compiler_params=pltpu.CompilerParams(
            dimension_semantics=("parallel", "parallel", "arbitrary"),
            vmem_limit_bytes=vmem_limit_bytes,
        ),
        cost_estimate=cost,
    )(a, b)

    if (Mp, Np) != (M, N):
        out = out[:M, :N]
    return out


if __name__ == "__main__":
    key = jax.random.PRNGKey(0)
    ka, kb, kc, kd = jax.random.split(key, 4)

    # Small shapes consistent with `a @ b` on 2-D operands.
    M, K, N = 128, 256, 256
    a = jax.random.normal(ka, (M, K), dtype=jnp.float32)
    b = jax.random.normal(kb, (K, N), dtype=jnp.float32)

    out = matmul(a, b)
    out = jax.block_until_ready(out)

    ref = a @ b
    assert out.shape == (M, N)
    assert jnp.allclose(out, ref, atol=1e-4, rtol=1e-4)

    # Ragged (non-tile-multiple) shapes exercise the padding path.
    M2, K2, N2 = 96, 200, 130
    a2 = jax.random.normal(kc, (M2, K2), dtype=jnp.float32)
    b2 = jax.random.normal(kd, (K2, N2), dtype=jnp.float32)
    out2 = jax.block_until_ready(matmul(a2, b2))
    assert out2.shape == (M2, N2)
    assert jnp.allclose(out2, a2 @ b2, atol=1e-4, rtol=1e-4)

    print("KERNEL_OK")
</pallas_src>

<mosaic_0001>
module attributes {stable_mosaic.version = 11 : i64} {
  func.func @matmul_kernel(%arg0: i32, %arg1: i32, %arg2: i32, %arg3: memref<128x256xf32, #tpu.memory_space<vmem>>, %arg4: memref<256x256xf32, #tpu.memory_space<vmem>>, %arg5: memref<128x256xf32, #tpu.memory_space<vmem>>, %arg6: memref<128x256xf32, #tpu.memory_space<vmem>>) attributes {dimension_semantics = [#tpu.dimension_semantics<parallel>, #tpu.dimension_semantics<parallel>, #tpu.dimension_semantics<arbitrary>], iteration_bounds = array<i64: 1, 1, 1>, scalar_prefetch = 0 : i64, scratch_operands = 1 : i64, tpu.core_type = #tpu.core_type<tc>, window_params = [{transform_indices = @transform_0, window_bounds = array<i64: 128, 256>}, {transform_indices = @transform_1, window_bounds = array<i64: 256, 256>}, {transform_indices = @transform_2, window_bounds = array<i64: 128, 256>}]} {
    %c0_i32 = arith.constant 0 : i32
    %0 = arith.cmpi eq, %arg2, %c0_i32 : i32
    %1 = arith.extui %0 : i1 to i32
    %c0_i32_0 = arith.constant 0 : i32
    %2 = arith.cmpi ne, %1, %c0_i32_0 : i32
    scf.if %2 {
      %cst_10 = arith.constant 0.000000e+00 : f32
      %12 = vector.broadcast %cst_10 : f32 to vector<128x256xf32>
      %c0_11 = arith.constant 0 : index
      %c0_12 = arith.constant 0 : index
      %13 = vector.load %arg6[%c0_11, %c0_12] : memref<128x256xf32, #tpu.memory_space<vmem>>, vector<128x256xf32>
      tpu.vector_store %arg6[%c0_11, %c0_12], %12 {strides = array<i32>} : memref<128x256xf32, #tpu.memory_space<vmem>>, vector<128x256xf32>,
    } else {
    }
    %c0 = arith.constant 0 : index
    %c0_1 = arith.constant 0 : index
    %3 = vector.load %arg6[%c0, %c0_1] : memref<128x256xf32, #tpu.memory_space<vmem>>, vector<128x256xf32>
    %c0_2 = arith.constant 0 : index
    %c0_3 = arith.constant 0 : index
    %4 = vector.load %arg3[%c0_2, %c0_3] : memref<128x256xf32, #tpu.memory_space<vmem>>, vector<128x256xf32>
    %c0_4 = arith.constant 0 : index
    %c0_5 = arith.constant 0 : index
    %5 = vector.load %arg4[%c0_4, %c0_5] : memref<256x256xf32, #tpu.memory_space<vmem>>, vector<256x256xf32>
    %cst = arith.constant dense<0.000000e+00> : vector<128x256xf32>
    %6 = tpu.matmul %4, %5, %cst {dimension_numbers = #tpu.dot_dimension_numbers<[1], [0], [0], [1], [0, 0, 1, 1], [], []>} : vector<128x256xf32>, vector<256x256xf32>, vector<128x256xf32> -> vector<128x256xf32>
    %7 = arith.addf %3, %6 : vector<128x256xf32>
    %c0_6 = arith.constant 0 : index
    %c0_7 = arith.constant 0 : index
    %8 = vector.load %arg6[%c0_6, %c0_7] : memref<128x256xf32, #tpu.memory_space<vmem>>, vector<128x256xf32>
    tpu.vector_store %arg6[%c0_6, %c0_7], %7 {strides = array<i32>} : memref<128x256xf32, #tpu.memory_space<vmem>>, vector<128x256xf32>,
    %c0_i32_8 = arith.constant 0 : i32
    %9 = arith.cmpi eq, %arg2, %c0_i32_8 : i32
    %10 = arith.extui %9 : i1 to i32
    %c0_i32_9 = arith.constant 0 : i32
    %11 = arith.cmpi ne, %10, %c0_i32_9 : i32
    scf.if %11 {
      %c0_10 = arith.constant 0 : index
      %c0_11 = arith.constant 0 : index
      %12 = vector.load %arg6[%c0_10, %c0_11] : memref<128x256xf32, #tpu.memory_space<vmem>>, vector<128x256xf32>
      %c0_12 = arith.constant 0 : index
      %c0_13 = arith.constant 0 : index
      %13 = vector.load %arg5[%c0_12, %c0_13] : memref<128x256xf32, #tpu.memory_space<vmem>>, vector<128x256xf32>
      tpu.vector_store %arg5[%c0_12, %c0_13], %12 {strides = array<i32>} : memref<128x256xf32, #tpu.memory_space<vmem>>, vector<128x256xf32>,
    } else {
    }
    return
  }
  func.func @transform_0(%arg0: i32, %arg1: i32, %arg2: i32) -> (i32, i32) {
    %c0_i32 = arith.constant 0 : i32
    return %arg0, %arg2 : i32, i32
  }
  func.func @transform_1(%arg0: i32, %arg1: i32, %arg2: i32) -> (i32, i32) {
    %c0_i32 = arith.constant 0 : i32
    return %arg2, %arg1 : i32, i32
  }
  func.func @transform_2(%arg0: i32, %arg1: i32, %arg2: i32) -> (i32, i32) {
    %c0_i32 = arith.constant 0 : i32
    return %arg0, %arg1 : i32, i32
  }
}

</mosaic_0001>

<llo_original>
// kernel: tpu_custom_call.1
$region0: #{tpu_custom_call.1}
  #allocation0 [shape = 'u32[]', space=smem, size = 0x4, offset = 0x4, fixed_abs, tag = 'smem constant byte address 0x4 - core index']
  #allocation1 [shape = 'u32[144,128]{1,0:T(1,128)}', space=vmem, size = 0x12000, scoped, tag = 'internal scratch']
  #allocation2 [shape = 'f32[128,256]{1,0:T(8,128)}', space=vmem, size = 0x20000, scoped, tag = 'scratch operand']
  %s0 = inlined_call_operand.hbm [shape: f32[128,256], index: 0, kind: input, shape index: {}]
  %s1 = inlined_call_operand.hbm [shape: f32[256,256], index: 1, kind: input, shape index: {}]
  %s2 = inlined_call_operand.hbm [shape: f32[128,256], index: 2, kind: output, shape index: {}]
  %s3 = sld [smem:[#allocation0]]
  $region34: #{tpu_custom_call.1} parent=0
    _
  %s5 = ssub.s32 1, %s3
  %s6 = scalar_select 0, %s5, %s3
  $region1: #{tpu_custom_call.1} parent=0
    #allocation3 [shape = 'u8[131072]{0}', space=vmem, size = 0x20000, scoped, tag = 'input window, operand 0, single buffered']
    #allocation4 [shape = 's32[1]{0}', space=sflag, size = 0x4, scoped, tag = 'scoped memory for tpu_custom_call.1']
    #allocation5 [shape = 's32[1]{0}', space=sflag, size = 0x4, scoped, tag = 'scoped memory for tpu_custom_call.1']
    #allocation6 [shape = 'u8[262144]{0}', space=vmem, size = 0x40000, scoped, tag = 'input window, operand 1, single buffered']
    #allocation7 [shape = 's32[1]{0}', space=sflag, size = 0x4, scoped, tag = 'scoped memory for tpu_custom_call.1']
    #allocation8 [shape = 'u8[131072]{0}', space=vmem, size = 0x20000, scoped, tag = 'output window, operand 0, single buffered']
    %7 = vsyncpa [#allocation4], 0
    %8 = vsyncpa [#allocation7], 0
    %9 = vsyncpa [#allocation5], 0
    // Predicated region
    $region2: #{tpu_custom_call.1} parent=1 // pred_check
      _
    $region3: #{tpu_custom_call.1} parent=1 // pred_check_branch
      %11 = sbr.rel (0) target = $region5
    $region4: #{tpu_custom_call.1} parent=1 // pred_region
      %s13 = ssub.s32 4096, 4096
      %14 = vsyncadd [#allocation4], %s13
      %s15 = sshll.u32 [#allocation3], 4
      %s16 = int_to_ptr.vmem [resolvable:$true] %s15
      %21 = dma.hbm_to_vmem [thread:$0]  %s0, 4096, %s16, [#allocation4], 256, 256, 16
    $region5: #{tpu_custom_call.1} parent=1 // pred_fallthru
      _
    // Predicated region
    $region6: #{tpu_custom_call.1} parent=1 // pred_check
      _
    $region7: #{tpu_custom_call.1} parent=1 // pred_check_branch
      %23 = sbr.rel (0) target = $region9
    $region8: #{tpu_custom_call.1} parent=1 // pred_region
      %s25 = ssub.s32 8192, 8192
      %26 = vsyncadd [#allocation7], %s25
      %s27 = sshll.u32 [#allocation6], 4
      %s28 = int_to_ptr.vmem [resolvable:$true] %s27
      %33 = dma.hbm_to_vmem [thread:$0]  %s1, 8192, %s28, [#allocation7], 256, 256, 16
    $region9: #{tpu_custom_call.1} parent=1 // pred_fallthru
      _
    // Predicated region
    $region10: #{tpu_custom_call.1} parent=1 // pred_check
      _
    $region11: #{tpu_custom_call.1} parent=1 // pred_check_branch
      %35 = sbr.rel (0) target = $region13
    $region12: #{tpu_custom_call.1} parent=1 // pred_region
      %36 = dma.done [#allocation4], 4096
    $region13: #{tpu_custom_call.1} parent=1 // pred_fallthru
      _
    // Predicated region
    $region14: #{tpu_custom_call.1} parent=1 // pred_check
      _
    $region15: #{tpu_custom_call.1} parent=1 // pred_check_branch
      %38 = sbr.rel (0) target = $region17
    $region16: #{tpu_custom_call.1} parent=1 // pred_region
      %39 = dma.done [#allocation7], 8192
    $region17: #{tpu_custom_call.1} parent=1 // pred_fallthru
      _
    %p40 = scmp.eq.s32.totalorder 0, 0
    // Predicated region
    $region18: #{tpu_custom_call.1} parent=1 // pred_check
      %p41 = pneg %p40
    $region19: #{tpu_custom_call.1} parent=1 // pred_check_branch
      %43 = sbr.rel (%p41) target = $region21
    $region20: #{tpu_custom_call.1} parent=1 // pred_region
      %44 = vst [vmem:[#allocation2] sm:$0xff] 0.0
      %45 = vst [vmem:[#allocation2 + $0x8] sm:$0xff] 0.0
      %46 = vst [vmem:[#allocation2 + $0x10] sm:$0xff] 0.0
      %47 = vst [vmem:[#allocation2 + $0x18] sm:$0xff] 0.0
      %48 = vst [vmem:[#allocation2 + $0x20] sm:$0xff] 0.0
      %49 = vst [vmem:[#allocation2 + $0x28] sm:$0xff] 0.0
      %50 = vst [vmem:[#allocation2 + $0x30] sm:$0xff] 0.0
      %51 = vst [vmem:[#allocation2 + $0x38] sm:$0xff] 0.0
      %52 = vst [vmem:[#allocation2 + $0x40] sm:$0xff] 0.0
      %53 = vst [vmem:[#allocation2 + $0x48] sm:$0xff] 0.0
      %54 = vst [vmem:[#allocation2 + $0x50] sm:$0xff] 0.0
      %55 = vst [vmem:[#allocation2 + $0x58] sm:$0xff] 0.0
      %56 = vst [vmem:[#allocation2 + $0x60] sm:$0xff] 0.0
      %57 = vst [vmem:[#allocation2 + $0x68] sm:$0xff] 0.0
      %58 = vst [vmem:[#allocation2 + $0x70] sm:$0xff] 0.0
      %59 = vst [vmem:[#allocation2 + $0x78] sm:$0xff] 0.0
      %60 = vst [vmem:[#allocation2 + $0x80] sm:$0xff] 0.0
      %61 = vst [vmem:[#allocation2 + $0x88] sm:$0xff] 0.0
      %62 = vst [vmem:[#allocation2 + $0x90] sm:$0xff] 0.0
      %63 = vst [vmem:[#allocation2 + $0x98] sm:$0xff] 0.0
      %64 = vst [vmem:[#allocation2 + $0xa0] sm:$0xff] 0.0
      %65 = vst [vmem:[#allocation2 + $0xa8] sm:$0xff] 0.0
      %66 = vst [vmem:[#allocation2 + $0xb0] sm:$0xff] 0.0
      %67 = vst [vmem:[#allocation2 + $0xb8] sm:$0xff] 0.0
      %68 = vst [vmem:[#allocation2 + $0xc0] sm:$0xff] 0.0
      %69 = vst [vmem:[#allocation2 + $0xc8] sm:$0xff] 0.0
      %70 = vst [vmem:[#allocation2 + $0xd0] sm:$0xff] 0.0
      %71 = vst [vmem:[#allocation2 + $0xd8] sm:$0xff] 0.0
      %72 = vst [vmem:[#allocation2 + $0xe0] sm:$0xff] 0.0
      %73 = vst [vmem:[#allocation2 + $0xe8] sm:$0xff] 0.0
      %74 = vst [vmem:[#allocation2 + $0xf0] sm:$0xff] 0.0
      %75 = vst [vmem:[#allocation2 + $0xf8] sm:$0xff] 0.0
    $region21: #{tpu_custom_call.1} parent=1 // pred_fallthru
      _
    %v76 = vld [vmem:[#allocation2] sm:$0xff]
    %v77 = vld [vmem:[#allocation2 + $0x8] sm:$0xff]
    %v78 = vld [vmem:[#allocation2 + $0x10] sm:$0xff]
    %v79 = vld [vmem:[#allocation2 + $0x18] sm:$0xff]
    %v80 = vld [vmem:[#allocation2 + $0x20] sm:$0xff]
    %v81 = vld [vmem:[#allocation2 + $0x28] sm:$0xff]
    %v82 = vld [vmem:[#allocation2 + $0x30] sm:$0xff]
    %v83 = vld [vmem:[#allocation2 + $0x38] sm:$0xff]
    %v84 = vld [vmem:[#allocation2 + $0x40] sm:$0xff]
    %v85 = vld [vmem:[#allocation2 + $0x48] sm:$0xff]
    %v86 = vld [vmem:[#allocation2 + $0x50] sm:$0xff]
    %v87 = vld [vmem:[#allocation2 + $0x58] sm:$0xff]
    %v88 = vld [vmem:[#allocation2 + $0x60] sm:$0xff]
    %v89 = vld [vmem:[#allocation2 + $0x68] sm:$0xff]
    %v90 = vld [vmem:[#allocation2 + $0x70] sm:$0xff]
    %v91 = vld [vmem:[#allocation2 + $0x78] sm:$0xff]
    %v92 = vld [vmem:[#allocation2 + $0x80] sm:$0xff]
    %v93 = vld [vmem:[#allocation2 + $0x88] sm:$0xff]
    %v94 = vld [vmem:[#allocation2 + $0x90] sm:$0xff]
    %v95 = vld [vmem:[#allocation2 + $0x98] sm:$0xff]
    %v96 = vld [vmem:[#allocation2 + $0xa0] sm:$0xff]
    %v97 = vld [vmem:[#allocation2 + $0xa8] sm:$0xff]
    %v98 = vld [vmem:[#allocation2 + $0xb0] sm:$0xff]
    %v99 = vld [vmem:[#allocation2 + $0xb8] sm:$0xff]
    %v100 = vld [vmem:[#allocation2 + $0xc0] sm:$0xff]
    %v101 = vld [vmem:[#allocation2 + $0xc8] sm:$0xff]
    %v102 = vld [vmem:[#allocation2 + $0xd0] sm:$0xff]
    %v103 = vld [vmem:[#allocation2 + $0xd8] sm:$0xff]
    %v104 = vld [vmem:[#allocation2 + $0xe0] sm:$0xff]
    %v105 = vld [vmem:[#allocation2 + $0xe8] sm:$0xff]
    %v106 = vld [vmem:[#allocation2 + $0xf0] sm:$0xff]
    %v107 = vld [vmem:[#allocation2 + $0xf8] sm:$0xff]
    %v108 = vld [vmem:[#allocation3] sm:$0xff]
    %v109 = vld [vmem:[#allocation3 + $0x8] sm:$0xff]
    %v110 = vld [vmem:[#allocation3 + $0x10] sm:$0xff]
    %v111 = vld [vmem:[#allocation3 + $0x18] sm:$0xff]
    %v112 = vld [vmem:[#allocation3 + $0x20] sm:$0xff]
    %v113 = vld [vmem:[#allocation3 + $0x28] sm:$0xff]
    %v114 = vld [vmem:[#allocation3 + $0x30] sm:$0xff]
    %v115 = vld [vmem:[#allocation3 + $0x38] sm:$0xff]
    %v116 = vld [vmem:[#allocation3 + $0x40] sm:$0xff]
    %v117 = vld [vmem:[#allocation3 + $0x48] sm:$0xff]
    %v118 = vld [vmem:[#allocation3 + $0x50] sm:$0xff]
    %v119 = vld [vmem:[#allocation3 + $0x58] sm:$0xff]
    %v120 = vld [vmem:[#allocation3 + $0x60] sm:$0xff]
    %v121 = vld [vmem:[#allocation3 + $0x68] sm:$0xff]
    %v122 = vld [vmem:[#allocation3 + $0x70] sm:$0xff]
    %v123 = vld [vmem:[#allocation3 + $0x78] sm:$0xff]
    %v124 = vld [vmem:[#allocation3 + $0x80] sm:$0xff]
    %v125 = vld [vmem:[#allocation3 + $0x88] sm:$0xff]
    %v126 = vld [vmem:[#allocation3 + $0x90] sm:$0xff]
    %v127 = vld [vmem:[#allocation3 + $0x98] sm:$0xff]
    %v128 = vld [vmem:[#allocation3 + $0xa0] sm:$0xff]
    %v129 = vld [vmem:[#allocation3 + $0xa8] sm:$0xff]
    %v130 = vld [vmem:[#allocation3 + $0xb0] sm:$0xff]
    %v131 = vld [vmem:[#allocation3 + $0xb8] sm:$0xff]
    %v132 = vld [vmem:[#allocation3 + $0xc0] sm:$0xff]
    %v133 = vld [vmem:[#allocation3 + $0xc8] sm:$0xff]
    %v134 = vld [vmem:[#allocation3 + $0xd0] sm:$0xff]
    %v135 = vld [vmem:[#allocation3 + $0xd8] sm:$0xff]
    %v136 = vld [vmem:[#allocation3 + $0xe0] sm:$0xff]
    %v137 = vld [vmem:[#allocation3 + $0xe8] sm:$0xff]
    %v138 = vld [vmem:[#allocation3 + $0xf0] sm:$0xff]
    %v139 = vld [vmem:[#allocation3 + $0xf8] sm:$0xff]
    %v140 = vld [vmem:[#allocation6] sm:$0xff]
    %v141 = vld [vmem:[#allocation6 + $0x8] sm:$0xff]
    %v142 = vld [vmem:[#allocation6 + $0x10] sm:$0xff]
    %v143 = vld [vmem:[#allocation6 + $0x18] sm:$0xff]
    %v144 = vld [vmem:[#allocation6 + $0x20] sm:$0xff]
    %v145 = vld [vmem:[#allocation6 + $0x28] sm:$0xff]
    %v146 = vld [vmem:[#allocation6 + $0x30] sm:$0xff]
    %v147 = vld [vmem:[#allocation6 + $0x38] sm:$0xff]
    %v148 = vld [vmem:[#allocation6 + $0x40] sm:$0xff]
    %v149 = vld [vmem:[#allocation6 + $0x48] sm:$0xff]
    %v150 = vld [vmem:[#allocation6 + $0x50] sm:$0xff]
    %v151 = vld [vmem:[#allocation6 + $0x58] sm:$0xff]
    %v152 = vld [vmem:[#allocation6 + $0x60] sm:$0xff]
    %v153 = vld [vmem:[#allocation6 + $0x68] sm:$0xff]
    %v154 = vld [vmem:[#allocation6 + $0x70] sm:$0xff]
    %v155 = vld [vmem:[#allocation6 + $0x78] sm:$0xff]
    %v156 = vld [vmem:[#allocation6 + $0x80] sm:$0xff]
    %v157 = vld [vmem:[#allocation6 + $0x88] sm:$0xff]
    %v158 = vld [vmem:[#allocation6 + $0x90] sm:$0xff]
    %v159 = vld [vmem:[#allocation6 + $0x98] sm:$0xff]
    %v160 = vld [vmem:[#allocation6 + $0xa0] sm:$0xff]
    %v161 = vld [vmem:[#allocation6 + $0xa8] sm:$0xff]
    %v162 = vld [vmem:[#allocation6 + $0xb0] sm:$0xff]
    %v163 = vld [vmem:[#allocation6 + $0xb8] sm:$0xff]
    %v164 = vld [vmem:[#allocation6 + $0xc0] sm:$0xff]
    %v165 = vld [vmem:[#allocation6 + $0xc8] sm:$0xff]
    %v166 = vld [vmem:[#allocation6 + $0xd0] sm:$0xff]
    %v167 = vld [vmem:[#allocation6 + $0xd8] sm:$0xff]
    %v168 = vld [vmem:[#allocation6 + $0xe0] sm:$0xff]
    %v169 = vld [vmem:[#allocation6 + $0xe8] sm:$0xff]
    %v170 = vld [vmem:[#allocation6 + $0xf0] sm:$0xff]
    %v171 = vld [vmem:[#allocation6 + $0xf8] sm:$0xff]
    %v172 = vld [vmem:[#allocation6 + $0x100] sm:$0xff]
    %v173 = vld [vmem:[#allocation6 + $0x108] sm:$0xff]
    %v174 = vld [vmem:[#allocation6 + $0x110] sm:$0xff]
    %v175 = vld [vmem:[#allocation6 + $0x118] sm:$0xff]
    %v176 = vld [vmem:[#allocation6 + $0x120] sm:$0xff]
    %v177 = vld [vmem:[#allocation6 + $0x128] sm:$0xff]
    %v178 = vld [vmem:[#allocation6 + $0x130] sm:$0xff]
    %v179 = vld [vmem:[#allocation6 + $0x138] sm:$0xff]
    %v180 = vld [vmem:[#allocation6 + $0x140] sm:$0xff]
    %v181 = vld [vmem:[#allocation6 + $0x148] sm:$0xff]
    %v182 = vld [vmem:[#allocation6 + $0x150] sm:$0xff]
    %v183 = vld [vmem:[#allocation6 + $0x158] sm:$0xff]
    %v184 = vld [vmem:[#allocation6 + $0x160] sm:$0xff]
    %v185 = vld [vmem:[#allocation6 + $0x168] sm:$0xff]
    %v186 = vld [vmem:[#allocation6 + $0x170] sm:$0xff]
    %v187 = vld [vmem:[#allocation6 + $0x178] sm:$0xff]
    %v188 = vld [vmem:[#allocation6 + $0x180] sm:$0xff]
    %v189 = vld [vmem:[#allocation6 + $0x188] sm:$0xff]
    %v190 = vld [vmem:[#allocation6 + $0x190] sm:$0xff]
    %v191 = vld [vmem:[#allocation6 + $0x198] sm:$0xff]
    %v192 = vld [vmem:[#allocation6 + $0x1a0] sm:$0xff]
    %v193 = vld [vmem:[#allocation6 + $0x1a8] sm:$0xff]
    %v194 = vld [vmem:[#allocation6 + $0x1b0] sm:$0xff]
    %v195 = vld [vmem:[#allocation6 + $0x1b8] sm:$0xff]
    %v196 = vld [vmem:[#allocation6 + $0x1c0] sm:$0xff]
    %v197 = vld [vmem:[#allocation6 + $0x1c8] sm:$0xff]
    %v198 = vld [vmem:[#allocation6 + $0x1d0] sm:$0xff]
    %v199 = vld [vmem:[#allocation6 + $0x1d8] sm:$0xff]
    %v200 = vld [vmem:[#allocation6 + $0x1e0] sm:$0xff]
    %v201 = vld [vmem:[#allocation6 + $0x1e8] sm:$0xff]
    %v202 = vld [vmem:[#allocation6 + $0x1f0] sm:$0xff]
    %v203 = vld [vmem:[#allocation6 + $0x1f8] sm:$0xff]
    %204 = vmatprep.subr.mxu0 %v141
    %205 = vmatpush1.msra.mxu0 %v140
    %206 = vmatprep.subr.mxu0 %v143
    %207 = vmatpush1.msra.mxu0 %v142
    %208 = vmatprep.subr.mxu0 %v145
    %209 = vmatpush1.msra.mxu0 %v144
    %210 = vmatprep.subr.mxu0 %v147
    %211 = vmatpush1.msra.mxu0 %v146
    %212 = vmatprep.subr.mxu0 %v149
    %213 = vmatpush1.msra.mxu0 %v148
    %214 = vmatprep.subr.mxu0 %v151
    %215 = vmatpush1.msra.mxu0 %v150
    %216 = vmatprep.subr.mxu0 %v153
    %217 = vmatpush1.msra.mxu0 %v152
    %218 = vmatprep.subr.mxu0 %v155
    %219 = vmatpush1.msra.mxu0 %v154
    %220 = vmatprep.subr.mxu0 %v157
    %221 = vmatpush1.msra.mxu0 %v156
    %222 = vmatprep.subr.mxu0 %v159
    %223 = vmatpush1.msra.mxu0 %v158
    %224 = vmatprep.subr.mxu0 %v161
    %225 = vmatpush1.msra.mxu0 %v160
    %226 = vmatprep.subr.mxu0 %v163
    %227 = vmatpush1.msra.mxu0 %v162
    %228 = vmatprep.subr.mxu0 %v165
    %229 = vmatpush1.msra.mxu0 %v164
    %230 = vmatprep.subr.mxu0 %v167
    %231 = vmatpush1.msra.mxu0 %v166
    %232 = vmatprep.subr.mxu0 %v169
    %233 = vmatpush1.msra.mxu0 %v168
    %234 = vmatprep.subr.mxu0 %v171
    %235 = vmatpush1.msra.mxu0 %v170
    %236 = vmatprep.subr.mxu0 %v173
    %237 = vmatpush1.msra.mxu0 %v172
    %238 = vmatprep.subr.mxu0 %v175
    %239 = vmatpush1.msra.mxu0 %v174
    %240 = vmatprep.subr.mxu0 %v177
    %241 = vmatpush1.msra.mxu0 %v176
    %242 = vmatprep.subr.mxu0 %v179
    %243 = vmatpush1.msra.mxu0 %v178
    %244 = vmatprep.subr.mxu0 %v181
    %245 = vmatpush1.msra.mxu0 %v180
    %246 = vmatprep.subr.mxu0 %v183
    %247 = vmatpush1.msra.mxu0 %v182
    %248 = vmatprep.subr.mxu0 %v185
    %249 = vmatpush1.msra.mxu0 %v184
    %250 = vmatprep.subr.mxu0 %v187
    %251 = vmatpush1.msra.mxu0 %v186
    %252 = vmatprep.subr.mxu0 %v189
    %253 = vmatpush1.msra.mxu0 %v188
    %254 = vmatprep.subr.mxu0 %v191
    %255 = vmatpush1.msra.mxu0 %v190
    %256 = vmatprep.subr.mxu0 %v193
    %257 = vmatpush1.msra.mxu0 %v192
    %258 = vmatprep.subr.mxu0 %v195
    %259 = vmatpush1.msra.mxu0 %v194
    %260 = vmatprep.subr.mxu0 %v197
    %261 = vmatpush1.msra.mxu0 %v196
    %262 = vmatprep.subr.mxu0 %v199
    %263 = vmatpush1.msra.mxu0 %v198
    %264 = vmatprep.subr.mxu0 %v201
    %265 = vmatpush1.msra.mxu0 %v200
    %266 = vmatprep.subr.mxu0 %v203
    %267 = vmatpush1.msra.mxu0 %v202
    %268 = vmatprep.mubr.f32.mxu0 %v109
    %269 = vmatmul.mubr.f32.gmra.mrb[0].mxu0 %v108
    %v270 = vpop.f32.mrb[0].mxu0
    %v271 = vadd.f32 0.0, %v270
    %v272 = vpop.f32.mrb[0].mxu0
    %v273 = vadd.f32 0.0, %v272
    %274 = vmatprep.mubr.f32.mxu0 %v111
    %275 = vmatmul.mubr.f32.gmra.mrb[0].mxu0 %v110
    %v276 = vpop.f32.mrb[0].mxu0
    %v277 = vadd.f32 0.0, %v276
    %v278 = vpop.f32.mrb[0].mxu0
    %v279 = vadd.f32 0.0, %v278
    %280 = vmatprep.mubr.f32.mxu0 %v113
    %281 = vmatmul.mubr.f32.gmra.mrb[0].mxu0 %v112
    %v282 = vpop.f32.mrb[0].mxu0
    %v283 = vadd.f32 0.0, %v282
    %v284 = vpop.f32.mrb[0].mxu0
    %v285 = vadd.f32 0.0, %v284
    %286 = vmatprep.mubr.f32.mxu0 %v115
    %287 = vmatmul.mubr.f32.gmra.mrb[0].mxu0 %v114
    %v288 = vpop.f32.mrb[0].mxu0
    %v289 = vadd.f32 0.0, %v288
    %v290 = vpop.f32.mrb[0].mxu0
    %v291 = vadd.f32 0.0, %v290
    %292 = vmatprep.mubr.f32.mxu0 %v117
    %293 = vmatmul.mubr.f32.gmra.mrb[0].mxu0 %v116
    %v294 = vpop.f32.mrb[0].mxu0
    %v295 = vadd.f32 0.0, %v294
    %v296 = vpop.f32.mrb[0].mxu0
    %v297 = vadd.f32 0.0, %v296
    %298 = vmatprep.mubr.f32.mxu0 %v119
    %299 = vmatmul.mubr.f32.gmra.mrb[0].mxu0 %v118
    %v300 = vpop.f32.mrb[0].mxu0
    %v301 = vadd.f32 0.0, %v300
    %v302 = vpop.f32.mrb[0].mxu0
    %v303 = vadd.f32 0.0, %v302
    %304 = vmatprep.mubr.f32.mxu0 %v121
    %305 = vmatmul.mubr.f32.gmra.mrb[0].mxu0 %v120
    %v306 = vpop.f32.mrb[0].mxu0
    %v307 = vadd.f32 0.0, %v306
    %v308 = vpop.f32.mrb[0].mxu0
    %v309 = vadd.f32 0.0, %v308
    %310 = vmatprep.mubr.f32.mxu0 %v123
    %311 = vmatmul.mubr.f32.gmra.mrb[0].mxu0 %v122
    %v312 = vpop.f32.mrb[0].mxu0
    %v313 = vadd.f32 0.0, %v312
    %v314 = vpop.f32.mrb[0].mxu0
    %v315 = vadd.f32 0.0, %v314
    %316 = vmatprep.mubr.f32.mxu0 %v125
    %317 = vmatmul.mubr.f32.gmra.mrb[0].mxu0 %v124
    %v318 = vpop.f32.mrb[0].mxu0
    %v319 = vadd.f32 0.0, %v318
    %v320 = vpop.f32.mrb[0].mxu0
    %v321 = vadd.f32 0.0, %v320
    %322 = vmatprep.mubr.f32.mxu0 %v127
    %323 = vmatmul.mubr.f32.gmra.mrb[0].mxu0 %v126
    %v324 = vpop.f32.mrb[0].mxu0
    %v325 = vadd.f32 0.0, %v324
    %v326 = vpop.f32.mrb[0].mxu0
    %v327 = vadd.f32 0.0, %v326
    %328 = vmatprep.mubr.f32.mxu0 %v129
    %329 = vmatmul.mubr.f32.gmra.mrb[0].mxu0 %v128
    %v330 = vpop.f32.mrb[0].mxu0
    %v331 = vadd.f32 0.0, %v330
    %v332 = vpop.f32.mrb[0].mxu0
    %v333 = vadd.f32 0.0, %v332
    %334 = vmatprep.mubr.f32.mxu0 %v131
    %335 = vmatmul.mubr.f32.gmra.mrb[0].mxu0 %v130
    %v336 = vpop.f32.mrb[0].mxu0
    %v337 = vadd.f32 0.0, %v336
    %v338 = vpop.f32.mrb[0].mxu0
    %v339 = vadd.f32 0.0, %v338
    %340 = vmatprep.mubr.f32.mxu0 %v133
    %341 = vmatmul.mubr.f32.gmra.mrb[0].mxu0 %v132
    %v342 = vpop.f32.mrb[0].mxu0
    %v343 = vadd.f32 0.0, %v342
    %v344 = vpop.f32.mrb[0].mxu0
    %v345 = vadd.f32 0.0, %v344
    %346 = vmatprep.mubr.f32.mxu0 %v135
    %347 = vmatmul.mubr.f32.gmra.mrb[0].mxu0 %v134
    %v348 = vpop.f32.mrb[0].mxu0
    %v349 = vadd.f32 0.0, %v348
    %v350 = vpop.f32.mrb[0].mxu0
    %v351 = vadd.f32 0.0, %v350
    %352 = vmatprep.mubr.f32.mxu0 %v137
    %353 = vmatmul.mubr.f32.gmra.mrb[0].mxu0 %v136
    %v354 = vpop.f32.mrb[0].mxu0
    %v355 = vadd.f32 0.0, %v354
    %v356 = vpop.f32.mrb[0].mxu0
    %v357 = vadd.f32 0.0, %v356
    %358 = vmatprep.mubr.f32.mxu0 %v139
    %359 = vmatmul.mubr.f32.gmra.mrb[0].mxu0 %v138
    %v360 = vpop.f32.mrb[0].mxu0
    %v361 = vadd.f32 0.0, %v360
    %v362 = vpop.f32.mrb[0].mxu0
    %v363 = vadd.f32 0.0, %v362
    %364 = vdwg.mxu0
    %v365 = vadd.f32 %v76, %v271
    %v366 = vadd.f32 %v77, %v273
    %v367 = vadd.f32 %v78, %v277
    %v368 = vadd.f32 %v79, %v279
    %v369 = vadd.f32 %v80, %v283
    %v370 = vadd.f32 %v81, %v285
    %v371 = vadd.f32 %v82, %v289
    %v372 = vadd.f32 %v83, %v291
    %v373 = vadd.f32 %v84, %v295
    %v374 = vadd.f32 %v85, %v297
    %v375 = vadd.f32 %v86, %v301
    %v376 = vadd.f32 %v87, %v303
    %v377 = vadd.f32 %v88, %v307
    %v378 = vadd.f32 %v89, %v309
    %v379 = vadd.f32 %v90, %v313
    %v380 = vadd.f32 %v91, %v315
    %v381 = vadd.f32 %v92, %v319
    %v382 = vadd.f32 %v93, %v321
    %v383 = vadd.f32 %v94, %v325
    %v384 = vadd.f32 %v95, %v327
    %v385 = vadd.f32 %v96, %v331
    %v386 = vadd.f32 %v97, %v333
    %v387 = vadd.f32 %v98, %v337
    %v388 = vadd.f32 %v99, %v339
    %v389 = vadd.f32 %v100, %v343
    %v390 = vadd.f32 %v101, %v345
    %v391 = vadd.f32 %v102, %v349
    %v392 = vadd.f32 %v103, %v351
    %v393 = vadd.f32 %v104, %v355
    %v394 = vadd.f32 %v105, %v357
    %v395 = vadd.f32 %v106, %v361
    %v396 = vadd.f32 %v107, %v363
    %397 = vst [vmem:[#allocation2] sm:$0xff] %v365
    %398 = vst [vmem:[#allocation2 + $0x8] sm:$0xff] %v366
    %399 = vst [vmem:[#allocation2 + $0x10] sm:$0xff] %v367
    %400 = vst [vmem:[#allocation2 + $0x18] sm:$0xff] %v368
    %401 = vst [vmem:[#allocation2 + $0x20] sm:$0xff] %v369
    %402 = vst [vmem:[#allocation2 + $0x28] sm:$0xff] %v370
    %403 = vst [vmem:[#allocation2 + $0x30] sm:$0xff] %v371
    %404 = vst [vmem:[#allocation2 + $0x38] sm:$0xff] %v372
    %405 = vst [vmem:[#allocation2 + $0x40] sm:$0xff] %v373
    %406 = vst [vmem:[#allocation2 + $0x48] sm:$0xff] %v374
    %407 = vst [vmem:[#allocation2 + $0x50] sm:$0xff] %v375
    %408 = vst [vmem:[#allocation2 + $0x58] sm:$0xff] %v376
    %409 = vst [vmem:[#allocation2 + $0x60] sm:$0xff] %v377
    %410 = vst [vmem:[#allocation2 + $0x68] sm:$0xff] %v378
    %411 = vst [vmem:[#allocation2 + $0x70] sm:$0xff] %v379
    %412 = vst [vmem:[#allocation2 + $0x78] sm:$0xff] %v380
    %413 = vst [vmem:[#allocation2 + $0x80] sm:$0xff] %v381
    %414 = vst [vmem:[#allocation2 + $0x88] sm:$0xff] %v382
    %415 = vst [vmem:[#allocation2 + $0x90] sm:$0xff] %v383
    %416 = vst [vmem:[#allocation2 + $0x98] sm:$0xff] %v384
    %417 = vst [vmem:[#allocation2 + $0xa0] sm:$0xff] %v385
    %418 = vst [vmem:[#allocation2 + $0xa8] sm:$0xff] %v386
    %419 = vst [vmem:[#allocation2 + $0xb0] sm:$0xff] %v387
    %420 = vst [vmem:[#allocation2 + $0xb8] sm:$0xff] %v388
    %421 = vst [vmem:[#allocation2 + $0xc0] sm:$0xff] %v389
    %422 = vst [vmem:[#allocation2 + $0xc8] sm:$0xff] %v390
    %423 = vst [vmem:[#allocation2 + $0xd0] sm:$0xff] %v391
    %424 = vst [vmem:[#allocation2 + $0xd8] sm:$0xff] %v392
    %425 = vst [vmem:[#allocation2 + $0xe0] sm:$0xff] %v393
    %426 = vst [vmem:[#allocation2 + $0xe8] sm:$0xff] %v394
    %427 = vst [vmem:[#allocation2 + $0xf0] sm:$0xff] %v395
    %428 = vst [vmem:[#allocation2 + $0xf8] sm:$0xff] %v396
    // Predicated region
    $region22: #{tpu_custom_call.1} parent=1 // pred_check
      %p429 = pneg %p40
    $region23: #{tpu_custom_call.1} parent=1 // pred_check_branch
      %431 = sbr.rel (%p429) target = $region25
    $region24: #{tpu_custom_call.1} parent=1 // pred_region
      %v432 = vld [vmem:[#allocation2] sm:$0xff]
      %v433 = vld [vmem:[#allocation2 + $0x8] sm:$0xff]
      %v434 = vld [vmem:[#allocation2 + $0x10] sm:$0xff]
      %v435 = vld [vmem:[#allocation2 + $0x18] sm:$0xff]
      %v436 = vld [vmem:[#allocation2 + $0x20] sm:$0xff]
      %v437 = vld [vmem:[#allocation2 + $0x28] sm:$0xff]
      %v438 = vld [vmem:[#allocation2 + $0x30] sm:$0xff]
      %v439 = vld [vmem:[#allocation2 + $0x38] sm:$0xff]
      %v440 = vld [vmem:[#allocation2 + $0x40] sm:$0xff]
      %v441 = vld [vmem:[#allocation2 + $0x48] sm:$0xff]
      %v442 = vld [vmem:[#allocation2 + $0x50] sm:$0xff]
      %v443 = vld [vmem:[#allocation2 + $0x58] sm:$0xff]
      %v444 = vld [vmem:[#allocation2 + $0x60] sm:$0xff]
      %v445 = vld [vmem:[#allocation2 + $0x68] sm:$0xff]
      %v446 = vld [vmem:[#allocation2 + $0x70] sm:$0xff]
      %v447 = vld [vmem:[#allocation2 + $0x78] sm:$0xff]
      %v448 = vld [vmem:[#allocation2 + $0x80] sm:$0xff]
      %v449 = vld [vmem:[#allocation2 + $0x88] sm:$0xff]
      %v450 = vld [vmem:[#allocation2 + $0x90] sm:$0xff]
      %v451 = vld [vmem:[#allocation2 + $0x98] sm:$0xff]
      %v452 = vld [vmem:[#allocation2 + $0xa0] sm:$0xff]
      %v453 = vld [vmem:[#allocation2 + $0xa8] sm:$0xff]
      %v454 = vld [vmem:[#allocation2 + $0xb0] sm:$0xff]
      %v455 = vld [vmem:[#allocation2 + $0xb8] sm:$0xff]
      %v456 = vld [vmem:[#allocation2 + $0xc0] sm:$0xff]
      %v457 = vld [vmem:[#allocation2 + $0xc8] sm:$0xff]
      %v458 = vld [vmem:[#allocation2 + $0xd0] sm:$0xff]
      %v459 = vld [vmem:[#allocation2 + $0xd8] sm:$0xff]
      %v460 = vld [vmem:[#allocation2 + $0xe0] sm:$0xff]
      %v461 = vld [vmem:[#allocation2 + $0xe8] sm:$0xff]
      %v462 = vld [vmem:[#allocation2 + $0xf0] sm:$0xff]
      %v463 = vld [vmem:[#allocation2 + $0xf8] sm:$0xff]
      %464 = vst [vmem:[#allocation8] sm:$0xff] %v432
      %465 = vst [vmem:[#allocation8 + $0x8] sm:$0xff] %v433
      %466 = vst [vmem:[#allocation8 + $0x10] sm:$0xff] %v434
      %467 = vst [vmem:[#allocation8 + $0x18] sm:$0xff] %v435
      %468 = vst [vmem:[#allocation8 + $0x20] sm:$0xff] %v436
      %469 = vst [vmem:[#allocation8 + $0x28] sm:$0xff] %v437
      %470 = vst [vmem:[#allocation8 + $0x30] sm:$0xff] %v438
      %471 = vst [vmem:[#allocation8 + $0x38] sm:$0xff] %v439
      %472 = vst [vmem:[#allocation8 + $0x40] sm:$0xff] %v440
      %473 = vst [vmem:[#allocation8 + $0x48] sm:$0xff] %v441
      %474 = vst [vmem:[#allocation8 + $0x50] sm:$0xff] %v442
      %475 = vst [vmem:[#allocation8 + $0x58] sm:$0xff] %v443
      %476 = vst [vmem:[#allocation8 + $0x60] sm:$0xff] %v444
      %477 = vst [vmem:[#allocation8 + $0x68] sm:$0xff] %v445
      %478 = vst [vmem:[#allocation8 + $0x70] sm:$0xff] %v446
      %479 = vst [vmem:[#allocation8 + $0x78] sm:$0xff] %v447
      %480 = vst [vmem:[#allocation8 + $0x80] sm:$0xff] %v448
      %481 = vst [vmem:[#allocation8 + $0x88] sm:$0xff] %v449
      %482 = vst [vmem:[#allocation8 + $0x90] sm:$0xff] %v450
      %483 = vst [vmem:[#allocation8 + $0x98] sm:$0xff] %v451
      %484 = vst [vmem:[#allocation8 + $0xa0] sm:$0xff] %v452
      %485 = vst [vmem:[#allocation8 + $0xa8] sm:$0xff] %v453
      %486 = vst [vmem:[#allocation8 + $0xb0] sm:$0xff] %v454
      %487 = vst [vmem:[#allocation8 + $0xb8] sm:$0xff] %v455
      %488 = vst [vmem:[#allocation8 + $0xc0] sm:$0xff] %v456
      %489 = vst [vmem:[#allocation8 + $0xc8] sm:$0xff] %v457
      %490 = vst [vmem:[#allocation8 + $0xd0] sm:$0xff] %v458
      %491 = vst [vmem:[#allocation8 + $0xd8] sm:$0xff] %v459
      %492 = vst [vmem:[#allocation8 + $0xe0] sm:$0xff] %v460
      %493 = vst [vmem:[#allocation8 + $0xe8] sm:$0xff] %v461
      %494 = vst [vmem:[#allocation8 + $0xf0] sm:$0xff] %v462
      %495 = vst [vmem:[#allocation8 + $0xf8] sm:$0xff] %v463
    $region25: #{tpu_custom_call.1} parent=1 // pred_fallthru
      _
    // Predicated region
    $region26: #{tpu_custom_call.1} parent=1 // pred_check
      _
    $region27: #{tpu_custom_call.1} parent=1 // pred_check_branch
      %497 = sbr.rel (0) target = $region29
    $region28: #{tpu_custom_call.1} parent=1 // pred_region
      %s499 = ssub.s32 4096, 4096
      %500 = vsyncadd [#allocation5], %s499
      %s501 = sshll.u32 [#allocation8], 4
      %s502 = int_to_ptr.vmem [resolvable:$true] %s501
      %507 = dma.vmem_to_hbm [thread:$0]  %s502, 4096, %s2, [#allocation5], 256, 256, 16
    $region29: #{tpu_custom_call.1} parent=1 // pred_fallthru
      _
    // Predicated region
    $region30: #{tpu_custom_call.1} parent=1 // pred_check
      _
    $region31: #{tpu_custom_call.1} parent=1 // pred_check_branch
      %509 = sbr.rel (0) target = $region33
    $region32: #{tpu_custom_call.1} parent=1 // pred_region
      %510 = dma.done [#allocation5], 4096
    $region33: #{tpu_custom_call.1} parent=1 // pred_fallthru
      _
    %511 = vsyncpa [#allocation4], 1
    %512 = vsyncpa [#allocation7], 1
    %513 = vsyncpa [#allocation5], 1

</llo_original>
